<compile_context>
chip_gen: v7x
topology: tpu7x:2x2x1
jax: 0.10.0
libtpu: 0.0.40
codegen_flags: <defaults>
</compile_context>

<pallas_src>
import jax
import jax.numpy as jnp
from jax.experimental import pallas as pl
from jax.experimental.pallas import tpu as pltpu


def _transition_kernel(x_ref, scale_ref, bias_ref, w_ref, o_ref):
    """One spatial tile of conv1x1(avg_pool2x2(relu(bn(x)))).

    x_ref:     (TH, 2, Wo, 2*C) f32  -- row pair on axis 1, column pair folded
                                        into the lane axis.
    scale_ref: (1, 2*C) f32          -- folded BN scale (duplicated per column pair)
    bias_ref:  (1, 2*C) f32          -- folded BN bias  (duplicated per column pair)
    w_ref:     (C, O)   bf16         -- 1x1 conv weight, resident in VMEM
    o_ref:     (TH*Wo, O) f32        -- lane-dense output tile
    """
    x = x_ref[...]
    # Fused BN (inference affine) + ReLU on the VPU.
    y = jnp.maximum(x * scale_ref[...] + bias_ref[...], 0.0)

    # 2x2 average pool with VPU adds (no pooling-matrix matmul):
    #   rows:    add the two slices of the pair axis
    #   columns: add the two C-wide halves of the lane axis
    z = y[:, 0] + y[:, 1]                       # (TH, Wo, 2*C)
    c = z.shape[-1] // 2
    p = (z[..., :c] + z[..., c:]) * 0.25        # (TH, Wo, C)

    # 1x1 conv as a single bf16 MXU matmul with f32 accumulation.
    th, wo, _ = p.shape
    lhs = p.reshape(th * wo, c).astype(jnp.bfloat16)
    acc = jnp.dot(lhs, w_ref[...], preferred_element_type=jnp.float32)
    o_ref[...] = acc.astype(o_ref.dtype)


def _pick_row_tile(m2, wo, c, vmem_budget_bytes=2 * 1024 * 1024):
    """Largest divisor of m2 whose f32 activation tile fits the budget and
    keeps the output tile sublane-aligned ((t * wo) % 8 == 0)."""
    row_bytes = 2 * wo * (2 * c) * 4            # one (2, Wo, 2C) f32 row slab
    cap = max(1, vmem_budget_bytes // row_bytes)
    for t in range(min(m2, cap), 0, -1):
        if m2 % t == 0 and (t * wo) % 8 == 0:
            return t
    return m2                                   # single full block (always legal)


def transition_forward(x, gamma, beta, running_mean, running_var, weight,
                       eps=1e-5):
    """Transition.forward: avg_pool2d(conv1x1(relu(bn(x))), 2).

    x:      (N, C, H, W) f32
    weight: (O, C) f32  (the (O, C, 1, 1) conv kernel, squeezed)
    returns (N, O, H//2, W//2) f32
    """
    N, C, H, W = x.shape
    O = weight.shape[0]
    Ho, Wo = H // 2, W // 2
    # avg_pool2d(kernel=2, stride=2) floors: drop an odd trailing row/column.
    x = x[:, :, :2 * Ho, :2 * Wo]

    # Fold BN (inference) into per-channel scale/bias once, outside the grid.
    scale = gamma * jax.lax.rsqrt(running_var + eps)
    bias = beta - running_mean * scale

    # NCHW -> NHWC, then fold the 2x2 pooling window: the row pair becomes a
    # leading axis, the column pair is merged into the lane (channel) axis.
    # Both reshapes are free on the contiguous NHWC layout.
    x_nhwc = jnp.transpose(x, (0, 2, 3, 1))                 # (N, 2Ho, 2Wo, C)
    x_r = x_nhwc.reshape(N * Ho, 2, Wo, 2 * C)

    scale2 = jnp.tile(scale, 2).reshape(1, 2 * C).astype(jnp.float32)
    bias2 = jnp.tile(bias, 2).reshape(1, 2 * C).astype(jnp.float32)
    w_co = weight.T.astype(jnp.bfloat16)                    # (C, O) MXU operand

    M2 = N * Ho
    TH = _pick_row_tile(M2, Wo, C)
    grid = (M2 // TH,)

    out_flat = pl.pallas_call(
        _transition_kernel,
        out_shape=jax.ShapeDtypeStruct((M2 * Wo, O), jnp.float32),
        grid=grid,
        in_specs=[
            pl.BlockSpec((TH, 2, Wo, 2 * C), lambda i: (i, 0, 0, 0)),
            pl.BlockSpec((1, 2 * C), lambda i: (0, 0)),
            pl.BlockSpec((1, 2 * C), lambda i: (0, 0)),
            pl.BlockSpec((C, O), lambda i: (0, 0)),          # resident weight
        ],
        out_specs=pl.BlockSpec((TH * Wo, O), lambda i: (i, 0)),
        compiler_params=pltpu.CompilerParams(
            dimension_semantics=("parallel",)),
    )(x_r, scale2, bias2, w_co)

    out = out_flat.reshape(N, Ho, Wo, O)
    return jnp.transpose(out, (0, 3, 1, 2))                  # back to NCHW


def _transition_reference(x, gamma, beta, running_mean, running_var, weight,
                          eps=1e-5):
    """Pure-JAX reference with the original op order (conv then pool)."""
    inv = jax.lax.rsqrt(running_var + eps)
    xn = (x - running_mean[None, :, None, None]) * inv[None, :, None, None]
    y = jnp.maximum(xn * gamma[None, :, None, None]
                    + beta[None, :, None, None], 0.0)
    z = jnp.einsum("nchw,oc->nohw", y, weight)               # 1x1 conv, no bias
    n, o, h, w = z.shape
    ho, wo = h // 2, w // 2
    z = z[:, :, :2 * ho, :2 * wo].reshape(n, o, ho, 2, wo, 2)
    return z.mean(axis=(3, 5))


if __name__ == "__main__":
    key = jax.random.PRNGKey(0)
    kx, kg, kb, km, kv, kw = jax.random.split(key, 6)

    N, C, O, H, W = 2, 256, 128, 16, 16          # DenseNet-like transition
    x = jax.random.normal(kx, (N, C, H, W), jnp.float32)
    gamma = 1.0 + 0.1 * jax.random.normal(kg, (C,), jnp.float32)
    beta = 0.1 * jax.random.normal(kb, (C,), jnp.float32)
    running_mean = 0.1 * jax.random.normal(km, (C,), jnp.float32)
    running_var = 1.0 + 0.1 * jax.random.uniform(kv, (C,), jnp.float32)
    weight = jax.random.normal(kw, (O, C), jnp.float32) / jnp.sqrt(C)

    out = jax.jit(transition_forward)(x, gamma, beta, running_mean,
                                      running_var, weight)
    out = jax.block_until_ready(out)

    ref = _transition_reference(x, gamma, beta, running_mean, running_var,
                                weight)
    assert out.shape == (N, O, H // 2, W // 2), out.shape
    err = float(jnp.max(jnp.abs(out - ref)))
    ref_mag = float(jnp.max(jnp.abs(ref))) + 1e-6
    assert err / ref_mag < 2e-2, f"relative error too large: {err / ref_mag}"
    print("KERNEL_OK")
</pallas_src>

<mosaic_0001>
module attributes {stable_mosaic.version = 11 : i64} {
  func.func @_transition_kernel(%arg0: i32, %arg1: memref<16x2x8x512xf32, #tpu.memory_space<vmem>>, %arg2: memref<1x512xf32, #tpu.memory_space<vmem>>, %arg3: memref<1x512xf32, #tpu.memory_space<vmem>>, %arg4: memref<256x128xbf16, #tpu.memory_space<vmem>>, %arg5: memref<128x128xf32, #tpu.memory_space<vmem>>) attributes {dimension_semantics = [#tpu.dimension_semantics<parallel>], iteration_bounds = array<i64: 1>, scalar_prefetch = 0 : i64, scratch_operands = 0 : i64, tpu.core_type = #tpu.core_type<tc>, window_params = [{transform_indices = @transform_0, window_bounds = array<i64: 16, 2, 8, 512>}, {pipeline_mode = #tpu.pipeline_mode<synchronous>, transform_indices = @transform_1, window_bounds = array<i64: 1, 512>}, {pipeline_mode = #tpu.pipeline_mode<synchronous>, transform_indices = @transform_2, window_bounds = array<i64: 1, 512>}, {pipeline_mode = #tpu.pipeline_mode<synchronous>, transform_indices = @transform_3, window_bounds = array<i64: 256, 128>}, {transform_indices = @transform_4, window_bounds = array<i64: 128, 128>}]} {
    %c0 = arith.constant 0 : index
    %c0_0 = arith.constant 0 : index
    %c0_1 = arith.constant 0 : index
    %c0_2 = arith.constant 0 : index
    %0 = vector.load %arg1[%c0, %c0_0, %c0_1, %c0_2] : memref<16x2x8x512xf32, #tpu.memory_space<vmem>>, vector<16x2x8x512xf32>
    %c0_3 = arith.constant 0 : index
    %c0_4 = arith.constant 0 : index
    %1 = vector.load %arg2[%c0_3, %c0_4] : memref<1x512xf32, #tpu.memory_space<vmem>>, vector<1x512xf32>
    %2 = vector.shape_cast %1 : vector<1x512xf32> to vector<1x1x1x512xf32>
    %3 = vector.broadcast %2 : vector<1x1x1x512xf32> to vector<16x2x8x512xf32>
    %4 = arith.mulf %0, %3 : vector<16x2x8x512xf32>
    %c0_5 = arith.constant 0 : index
    %c0_6 = arith.constant 0 : index
    %5 = vector.load %arg3[%c0_5, %c0_6] : memref<1x512xf32, #tpu.memory_space<vmem>>, vector<1x512xf32>
    %6 = vector.shape_cast %5 : vector<1x512xf32> to vector<1x1x1x512xf32>
    %7 = vector.broadcast %6 : vector<1x1x1x512xf32> to vector<16x2x8x512xf32>
    %8 = arith.addf %4, %7 : vector<16x2x8x512xf32>
    %cst = arith.constant 0.000000e+00 : f32
    %9 = vector.broadcast %cst : f32 to vector<16x2x8x512xf32>
    %10 = arith.maximumf %8, %9 : vector<16x2x8x512xf32>
    %11 = vector.extract_strided_slice %10 {offsets = [0, 0, 0, 0], sizes = [16, 1, 8, 512], strides = [1, 1, 1, 1]} : vector<16x2x8x512xf32> to vector<16x1x8x512xf32>
    %12 = vector.shape_cast %11 : vector<16x1x8x512xf32> to vector<16x8x512xf32>
    %13 = vector.extract_strided_slice %10 {offsets = [0, 1, 0, 0], sizes = [16, 1, 8, 512], strides = [1, 1, 1, 1]} : vector<16x2x8x512xf32> to vector<16x1x8x512xf32>
    %14 = vector.shape_cast %13 : vector<16x1x8x512xf32> to vector<16x8x512xf32>
    %15 = arith.addf %12, %14 : vector<16x8x512xf32>
    %16 = vector.extract_strided_slice %15 {offsets = [0, 0, 0], sizes = [16, 8, 256], strides = [1, 1, 1]} : vector<16x8x512xf32> to vector<16x8x256xf32>
    %17 = vector.extract_strided_slice %15 {offsets = [0, 0, 256], sizes = [16, 8, 256], strides = [1, 1, 1]} : vector<16x8x512xf32> to vector<16x8x256xf32>
    %18 = arith.addf %16, %17 : vector<16x8x256xf32>
    %cst_7 = arith.constant 2.500000e-01 : f32
    %19 = vector.broadcast %cst_7 : f32 to vector<16x8x256xf32>
    %20 = arith.mulf %18, %19 : vector<16x8x256xf32>
    %21 = vector.shape_cast %20 : vector<16x8x256xf32> to vector<128x256xf32>
    %22 = arith.truncf %21 : vector<128x256xf32> to vector<128x256xbf16>
    %c0_8 = arith.constant 0 : index
    %c0_9 = arith.constant 0 : index
    %23 = vector.load %arg4[%c0_8, %c0_9] : memref<256x128xbf16, #tpu.memory_space<vmem>>, vector<256x128xbf16>
    %cst_10 = arith.constant dense<0.000000e+00> : vector<128x128xf32>
    %24 = tpu.matmul %22, %23, %cst_10 {dimension_numbers = #tpu.dot_dimension_numbers<[1], [0], [0], [1], [0, 0, 1, 1], [], []>} : vector<128x256xbf16>, vector<256x128xbf16>, vector<128x128xf32> -> vector<128x128xf32>
    %c0_11 = arith.constant 0 : index
    %c0_12 = arith.constant 0 : index
    %25 = vector.load %arg5[%c0_11, %c0_12] : memref<128x128xf32, #tpu.memory_space<vmem>>, vector<128x128xf32>
    tpu.vector_store %arg5[%c0_11, %c0_12], %24 {strides = array<i32>} : memref<128x128xf32, #tpu.memory_space<vmem>>, vector<128x128xf32>,
    return
  }
  func.func @transform_0(%arg0: i32) -> (i32, i32, i32, i32) {
    %c0_i32 = arith.constant 0 : i32
    %c0_i32_0 = arith.constant 0 : i32
    %c0_i32_1 = arith.constant 0 : i32
    %c0_i32_2 = arith.constant 0 : i32
    return %arg0, %c0_i32, %c0_i32_0, %c0_i32_1 : i32, i32, i32, i32
  }
  func.func @transform_1(%arg0: i32) -> (i32, i32) {
    %c0_i32 = arith.constant 0 : i32
    %c0_i32_0 = arith.constant 0 : i32
    %c0_i32_1 = arith.constant 0 : i32
    return %c0_i32, %c0_i32_0 : i32, i32
  }
  func.func @transform_2(%arg0: i32) -> (i32, i32) {
    %c0_i32 = arith.constant 0 : i32
    %c0_i32_0 = arith.constant 0 : i32
    %c0_i32_1 = arith.constant 0 : i32
    return %c0_i32, %c0_i32_0 : i32, i32
  }
  func.func @transform_3(%arg0: i32) -> (i32, i32) {
    %c0_i32 = arith.constant 0 : i32
    %c0_i32_0 = arith.constant 0 : i32
    %c0_i32_1 = arith.constant 0 : i32
    return %c0_i32, %c0_i32_0 : i32, i32
  }
  func.func @transform_4(%arg0: i32) -> (i32, i32) {
    %c0_i32 = arith.constant 0 : i32
    %c0_i32_0 = arith.constant 0 : i32
    return %arg0, %c0_i32 : i32, i32
  }
}

</mosaic_0001>

<llo_original>
// kernel: transition_forward.1
$region0: #{transition_forward.1}
  #allocation0 [shape = 'u32[]', space=smem, size = 0x4, offset = 0x4, fixed_abs, tag = 'smem constant byte address 0x4 - core index']
  #allocation1 [shape = 'u32[144,128]{1,0:T(1,128)}', space=vmem, size = 0x12000, scoped, tag = 'internal scratch']
  %s0 = inlined_call_operand.vmem [shape: f32[16,2,8,512], index: 0, kind: input, shape index: {}]
  %s1 = inlined_call_operand.vmem [shape: f32[1,512], index: 1, kind: input, shape index: {}]
  %s2 = inlined_call_operand.vmem [shape: f32[1,512], index: 2, kind: input, shape index: {}]
  %s3 = inlined_call_operand.vmem [shape: bf16[256,128], index: 3, kind: input, shape index: {}]
  %s4 = inlined_call_operand.hbm [shape: f32[128,128], index: 4, kind: output, shape index: {}]
  %s5 = sld [smem:[#allocation0]]
  $region26: #{transition_forward.1} parent=0
    _
  %s7 = ssub.s32 1, %s5
  %s8 = scalar_select 0, %s7, %s5
  $region1: #{transition_forward.1} parent=0
    #allocation2 [shape = 'u8[65536]{0}', space=vmem, size = 0x10000, scoped, tag = 'output window, operand 0, single buffered']
    #allocation3 [shape = 's32[1]{0}', space=sflag, size = 0x4, scoped, tag = 'scoped memory for transition_forward.1']
    %9 = vsyncpa [#allocation3], 0
    // Predicated region
    $region2: #{transition_forward.1} parent=1 // pred_check
      _
    $region3: #{transition_forward.1} parent=1 // pred_check_branch
      %11 = sbr.rel (0) target = $region5
    $region4: #{transition_forward.1} parent=1 // pred_region
      _
    $region5: #{transition_forward.1} parent=1 // pred_fallthru
      _
    // Predicated region
    $region6: #{transition_forward.1} parent=1 // pred_check
      _
    $region7: #{transition_forward.1} parent=1 // pred_check_branch
      %13 = sbr.rel (0) target = $region9
    $region8: #{transition_forward.1} parent=1 // pred_region
      _
    $region9: #{transition_forward.1} parent=1 // pred_fallthru
      _
    // Predicated region
    $region10: #{transition_forward.1} parent=1 // pred_check
      _
    $region11: #{transition_forward.1} parent=1 // pred_check_branch
      %15 = sbr.rel (0) target = $region13
    $region12: #{transition_forward.1} parent=1 // pred_region
      _
    $region13: #{transition_forward.1} parent=1 // pred_fallthru
      _
    // Predicated region
    $region14: #{transition_forward.1} parent=1 // pred_check
      _
    $region15: #{transition_forward.1} parent=1 // pred_check_branch
      %17 = sbr.rel (0) target = $region17
    $region16: #{transition_forward.1} parent=1 // pred_region
      _
    $region17: #{transition_forward.1} parent=1 // pred_fallthru
      _
    %v19 = vld [vmem:[%s0] sm:$0xff]
    %v20 = vld [vmem:[%s0 + $0x8] sm:$0xff]
    %v21 = vld [vmem:[%s0 + $0x10] sm:$0xff]
    %v22 = vld [vmem:[%s0 + $0x18] sm:$0xff]
    %v23 = vld [vmem:[%s0 + $0x20] sm:$0xff]
    %v24 = vld [vmem:[%s0 + $0x28] sm:$0xff]
    %v25 = vld [vmem:[%s0 + $0x30] sm:$0xff]
    %v26 = vld [vmem:[%s0 + $0x38] sm:$0xff]
    %v27 = vld [vmem:[%s0 + $0x40] sm:$0xff]
    %v28 = vld [vmem:[%s0 + $0x48] sm:$0xff]
    %v29 = vld [vmem:[%s0 + $0x50] sm:$0xff]
    %v30 = vld [vmem:[%s0 + $0x58] sm:$0xff]
    %v31 = vld [vmem:[%s0 + $0x60] sm:$0xff]
    %v32 = vld [vmem:[%s0 + $0x68] sm:$0xff]
    %v33 = vld [vmem:[%s0 + $0x70] sm:$0xff]
    %v34 = vld [vmem:[%s0 + $0x78] sm:$0xff]
    %v35 = vld [vmem:[%s0 + $0x80] sm:$0xff]
    %v36 = vld [vmem:[%s0 + $0x88] sm:$0xff]
    %v37 = vld [vmem:[%s0 + $0x90] sm:$0xff]
    %v38 = vld [vmem:[%s0 + $0x98] sm:$0xff]
    %v39 = vld [vmem:[%s0 + $0xa0] sm:$0xff]
    %v40 = vld [vmem:[%s0 + $0xa8] sm:$0xff]
    %v41 = vld [vmem:[%s0 + $0xb0] sm:$0xff]
    %v42 = vld [vmem:[%s0 + $0xb8] sm:$0xff]
    %v43 = vld [vmem:[%s0 + $0xc0] sm:$0xff]
    %v44 = vld [vmem:[%s0 + $0xc8] sm:$0xff]
    %v45 = vld [vmem:[%s0 + $0xd0] sm:$0xff]
    %v46 = vld [vmem:[%s0 + $0xd8] sm:$0xff]
    %v47 = vld [vmem:[%s0 + $0xe0] sm:$0xff]
    %v48 = vld [vmem:[%s0 + $0xe8] sm:$0xff]
    %v49 = vld [vmem:[%s0 + $0xf0] sm:$0xff]
    %v50 = vld [vmem:[%s0 + $0xf8] sm:$0xff]
    %v51 = vld [vmem:[%s0 + $0x100] sm:$0xff]
    %v52 = vld [vmem:[%s0 + $0x108] sm:$0xff]
    %v53 = vld [vmem:[%s0 + $0x110] sm:$0xff]
    %v54 = vld [vmem:[%s0 + $0x118] sm:$0xff]
    %v55 = vld [vmem:[%s0 + $0x120] sm:$0xff]
    %v56 = vld [vmem:[%s0 + $0x128] sm:$0xff]
    %v57 = vld [vmem:[%s0 + $0x130] sm:$0xff]
    %v58 = vld [vmem:[%s0 + $0x138] sm:$0xff]
    %v59 = vld [vmem:[%s0 + $0x140] sm:$0xff]
    %v60 = vld [vmem:[%s0 + $0x148] sm:$0xff]
    %v61 = vld [vmem:[%s0 + $0x150] sm:$0xff]
    %v62 = vld [vmem:[%s0 + $0x158] sm:$0xff]
    %v63 = vld [vmem:[%s0 + $0x160] sm:$0xff]
    %v64 = vld [vmem:[%s0 + $0x168] sm:$0xff]
    %v65 = vld [vmem:[%s0 + $0x170] sm:$0xff]
    %v66 = vld [vmem:[%s0 + $0x178] sm:$0xff]
    %v67 = vld [vmem:[%s0 + $0x180] sm:$0xff]
    %v68 = vld [vmem:[%s0 + $0x188] sm:$0xff]
    %v69 = vld [vmem:[%s0 + $0x190] sm:$0xff]
    %v70 = vld [vmem:[%s0 + $0x198] sm:$0xff]
    %v71 = vld [vmem:[%s0 + $0x1a0] sm:$0xff]
    %v72 = vld [vmem:[%s0 + $0x1a8] sm:$0xff]
    %v73 = vld [vmem:[%s0 + $0x1b0] sm:$0xff]
    %v74 = vld [vmem:[%s0 + $0x1b8] sm:$0xff]
    %v75 = vld [vmem:[%s0 + $0x1c0] sm:$0xff]
    %v76 = vld [vmem:[%s0 + $0x1c8] sm:$0xff]
    %v77 = vld [vmem:[%s0 + $0x1d0] sm:$0xff]
    %v78 = vld [vmem:[%s0 + $0x1d8] sm:$0xff]
    %v79 = vld [vmem:[%s0 + $0x1e0] sm:$0xff]
    %v80 = vld [vmem:[%s0 + $0x1e8] sm:$0xff]
    %v81 = vld [vmem:[%s0 + $0x1f0] sm:$0xff]
    %v82 = vld [vmem:[%s0 + $0x1f8] sm:$0xff]
    %v83 = vld [vmem:[%s0 + $0x200] sm:$0xff]
    %v84 = vld [vmem:[%s0 + $0x208] sm:$0xff]
    %v85 = vld [vmem:[%s0 + $0x210] sm:$0xff]
    %v86 = vld [vmem:[%s0 + $0x218] sm:$0xff]
    %v87 = vld [vmem:[%s0 + $0x220] sm:$0xff]
    %v88 = vld [vmem:[%s0 + $0x228] sm:$0xff]
    %v89 = vld [vmem:[%s0 + $0x230] sm:$0xff]
    %v90 = vld [vmem:[%s0 + $0x238] sm:$0xff]
    %v91 = vld [vmem:[%s0 + $0x240] sm:$0xff]
    %v92 = vld [vmem:[%s0 + $0x248] sm:$0xff]
    %v93 = vld [vmem:[%s0 + $0x250] sm:$0xff]
    %v94 = vld [vmem:[%s0 + $0x258] sm:$0xff]
    %v95 = vld [vmem:[%s0 + $0x260] sm:$0xff]
    %v96 = vld [vmem:[%s0 + $0x268] sm:$0xff]
    %v97 = vld [vmem:[%s0 + $0x270] sm:$0xff]
    %v98 = vld [vmem:[%s0 + $0x278] sm:$0xff]
    %v99 = vld [vmem:[%s0 + $0x280] sm:$0xff]
    %v100 = vld [vmem:[%s0 + $0x288] sm:$0xff]
    %v101 = vld [vmem:[%s0 + $0x290] sm:$0xff]
    %v102 = vld [vmem:[%s0 + $0x298] sm:$0xff]
    %v103 = vld [vmem:[%s0 + $0x2a0] sm:$0xff]
    %v104 = vld [vmem:[%s0 + $0x2a8] sm:$0xff]
    %v105 = vld [vmem:[%s0 + $0x2b0] sm:$0xff]
    %v106 = vld [vmem:[%s0 + $0x2b8] sm:$0xff]
    %v107 = vld [vmem:[%s0 + $0x2c0] sm:$0xff]
    %v108 = vld [vmem:[%s0 + $0x2c8] sm:$0xff]
    %v109 = vld [vmem:[%s0 + $0x2d0] sm:$0xff]
    %v110 = vld [vmem:[%s0 + $0x2d8] sm:$0xff]
    %v111 = vld [vmem:[%s0 + $0x2e0] sm:$0xff]
    %v112 = vld [vmem:[%s0 + $0x2e8] sm:$0xff]
    %v113 = vld [vmem:[%s0 + $0x2f0] sm:$0xff]
    %v114 = vld [vmem:[%s0 + $0x2f8] sm:$0xff]
    %v115 = vld [vmem:[%s0 + $0x300] sm:$0xff]
    %v116 = vld [vmem:[%s0 + $0x308] sm:$0xff]
    %v117 = vld [vmem:[%s0 + $0x310] sm:$0xff]
    %v118 = vld [vmem:[%s0 + $0x318] sm:$0xff]
    %v119 = vld [vmem:[%s0 + $0x320] sm:$0xff]
    %v120 = vld [vmem:[%s0 + $0x328] sm:$0xff]
    %v121 = vld [vmem:[%s0 + $0x330] sm:$0xff]
    %v122 = vld [vmem:[%s0 + $0x338] sm:$0xff]
    %v123 = vld [vmem:[%s0 + $0x340] sm:$0xff]
    %v124 = vld [vmem:[%s0 + $0x348] sm:$0xff]
    %v125 = vld [vmem:[%s0 + $0x350] sm:$0xff]
    %v126 = vld [vmem:[%s0 + $0x358] sm:$0xff]
    %v127 = vld [vmem:[%s0 + $0x360] sm:$0xff]
    %v128 = vld [vmem:[%s0 + $0x368] sm:$0xff]
    %v129 = vld [vmem:[%s0 + $0x370] sm:$0xff]
    %v130 = vld [vmem:[%s0 + $0x378] sm:$0xff]
    %v131 = vld [vmem:[%s0 + $0x380] sm:$0xff]
    %v132 = vld [vmem:[%s0 + $0x388] sm:$0xff]
    %v133 = vld [vmem:[%s0 + $0x390] sm:$0xff]
    %v134 = vld [vmem:[%s0 + $0x398] sm:$0xff]
    %v135 = vld [vmem:[%s0 + $0x3a0] sm:$0xff]
    %v136 = vld [vmem:[%s0 + $0x3a8] sm:$0xff]
    %v137 = vld [vmem:[%s0 + $0x3b0] sm:$0xff]
    %v138 = vld [vmem:[%s0 + $0x3b8] sm:$0xff]
    %v139 = vld [vmem:[%s0 + $0x3c0] sm:$0xff]
    %v140 = vld [vmem:[%s0 + $0x3c8] sm:$0xff]
    %v141 = vld [vmem:[%s0 + $0x3d0] sm:$0xff]
    %v142 = vld [vmem:[%s0 + $0x3d8] sm:$0xff]
    %v143 = vld [vmem:[%s0 + $0x3e0] sm:$0xff]
    %v144 = vld [vmem:[%s0 + $0x3e8] sm:$0xff]
    %v145 = vld [vmem:[%s0 + $0x3f0] sm:$0xff]
    %v146 = vld [vmem:[%s0 + $0x3f8] sm:$0xff]
    %v147 = vld [vmem:[%s1] sm:$0xf]
    %v149 = vlaneseq
    %v150 = vshrl.u32 %v149, 7
    %v151 = vsub.s32 0, %v150
    %v152 = vrot.slane %v147, %v151
    %v153 = vlaneseq
    %v154 = vshrl.u32 %v153, 7
    %v155 = vsub.s32 1, %v154
    %v156 = vrot.slane %v147, %v155
    %v157 = vlaneseq
    %v158 = vshrl.u32 %v157, 7
    %v159 = vsub.s32 2, %v158
    %v160 = vrot.slane %v147, %v159
    %v161 = vlaneseq
    %v162 = vshrl.u32 %v161, 7
    %v163 = vsub.s32 3, %v162
    %v164 = vrot.slane %v147, %v163
    %v169 = vmul.f32 %v19, %v152
    %v170 = vmul.f32 %v20, %v156
    %v171 = vmul.f32 %v21, %v160
    %v172 = vmul.f32 %v22, %v164
    %v173 = vmul.f32 %v23, %v152
    %v174 = vmul.f32 %v24, %v156
    %v175 = vmul.f32 %v25, %v160
    %v176 = vmul.f32 %v26, %v164
    %v177 = vmul.f32 %v27, %v152
    %v178 = vmul.f32 %v28, %v156
    %v179 = vmul.f32 %v29, %v160
    %v180 = vmul.f32 %v30, %v164
    %v181 = vmul.f32 %v31, %v152
    %v182 = vmul.f32 %v32, %v156
    %v183 = vmul.f32 %v33, %v160
    %v184 = vmul.f32 %v34, %v164
    %v185 = vmul.f32 %v35, %v152
    %v186 = vmul.f32 %v36, %v156
    %v187 = vmul.f32 %v37, %v160
    %v188 = vmul.f32 %v38, %v164
    %v189 = vmul.f32 %v39, %v152
    %v190 = vmul.f32 %v40, %v156
    %v191 = vmul.f32 %v41, %v160
    %v192 = vmul.f32 %v42, %v164
    %v193 = vmul.f32 %v43, %v152
    %v194 = vmul.f32 %v44, %v156
    %v195 = vmul.f32 %v45, %v160
    %v196 = vmul.f32 %v46, %v164
    %v197 = vmul.f32 %v47, %v152
    %v198 = vmul.f32 %v48, %v156
    %v199 = vmul.f32 %v49, %v160
    %v200 = vmul.f32 %v50, %v164
    %v201 = vmul.f32 %v51, %v152
    %v202 = vmul.f32 %v52, %v156
    %v203 = vmul.f32 %v53, %v160
    %v204 = vmul.f32 %v54, %v164
    %v205 = vmul.f32 %v55, %v152
    %v206 = vmul.f32 %v56, %v156
    %v207 = vmul.f32 %v57, %v160
    %v208 = vmul.f32 %v58, %v164
    %v209 = vmul.f32 %v59, %v152
    %v210 = vmul.f32 %v60, %v156
    %v211 = vmul.f32 %v61, %v160
    %v212 = vmul.f32 %v62, %v164
    %v213 = vmul.f32 %v63, %v152
    %v214 = vmul.f32 %v64, %v156
    %v215 = vmul.f32 %v65, %v160
    %v216 = vmul.f32 %v66, %v164
    %v217 = vmul.f32 %v67, %v152
    %v218 = vmul.f32 %v68, %v156
    %v219 = vmul.f32 %v69, %v160
    %v220 = vmul.f32 %v70, %v164
    %v221 = vmul.f32 %v71, %v152
    %v222 = vmul.f32 %v72, %v156
    %v223 = vmul.f32 %v73, %v160
    %v224 = vmul.f32 %v74, %v164
    %v225 = vmul.f32 %v75, %v152
    %v226 = vmul.f32 %v76, %v156
    %v227 = vmul.f32 %v77, %v160
    %v228 = vmul.f32 %v78, %v164
    %v229 = vmul.f32 %v79, %v152
    %v230 = vmul.f32 %v80, %v156
    %v231 = vmul.f32 %v81, %v160
    %v232 = vmul.f32 %v82, %v164
    %v233 = vmul.f32 %v83, %v152
    %v234 = vmul.f32 %v84, %v156
    %v235 = vmul.f32 %v85, %v160
    %v236 = vmul.f32 %v86, %v164
    %v237 = vmul.f32 %v87, %v152
    %v238 = vmul.f32 %v88, %v156
    %v239 = vmul.f32 %v89, %v160
    %v240 = vmul.f32 %v90, %v164
    %v241 = vmul.f32 %v91, %v152
    %v242 = vmul.f32 %v92, %v156
    %v243 = vmul.f32 %v93, %v160
    %v244 = vmul.f32 %v94, %v164
    %v245 = vmul.f32 %v95, %v152
    %v246 = vmul.f32 %v96, %v156
    %v247 = vmul.f32 %v97, %v160
    %v248 = vmul.f32 %v98, %v164
    %v249 = vmul.f32 %v99, %v152
    %v250 = vmul.f32 %v100, %v156
    %v251 = vmul.f32 %v101, %v160
    %v252 = vmul.f32 %v102, %v164
    %v253 = vmul.f32 %v103, %v152
    %v254 = vmul.f32 %v104, %v156
    %v255 = vmul.f32 %v105, %v160
    %v256 = vmul.f32 %v106, %v164
    %v257 = vmul.f32 %v107, %v152
    %v258 = vmul.f32 %v108, %v156
    %v259 = vmul.f32 %v109, %v160
    %v260 = vmul.f32 %v110, %v164
    %v261 = vmul.f32 %v111, %v152
    %v262 = vmul.f32 %v112, %v156
    %v263 = vmul.f32 %v113, %v160
    %v264 = vmul.f32 %v114, %v164
    %v265 = vmul.f32 %v115, %v152
    %v266 = vmul.f32 %v116, %v156
    %v267 = vmul.f32 %v117, %v160
    %v268 = vmul.f32 %v118, %v164
    %v269 = vmul.f32 %v119, %v152
    %v270 = vmul.f32 %v120, %v156
    %v271 = vmul.f32 %v121, %v160
    %v272 = vmul.f32 %v122, %v164
    %v273 = vmul.f32 %v123, %v152
    %v274 = vmul.f32 %v124, %v156
    %v275 = vmul.f32 %v125, %v160
    %v276 = vmul.f32 %v126, %v164
    %v277 = vmul.f32 %v127, %v152
    %v278 = vmul.f32 %v128, %v156
    %v279 = vmul.f32 %v129, %v160
    %v280 = vmul.f32 %v130, %v164
    %v281 = vmul.f32 %v131, %v152
    %v282 = vmul.f32 %v132, %v156
    %v283 = vmul.f32 %v133, %v160
    %v284 = vmul.f32 %v134, %v164
    %v285 = vmul.f32 %v135, %v152
    %v286 = vmul.f32 %v136, %v156
    %v287 = vmul.f32 %v137, %v160
    %v288 = vmul.f32 %v138, %v164
    %v289 = vmul.f32 %v139, %v152
    %v290 = vmul.f32 %v140, %v156
    %v291 = vmul.f32 %v141, %v160
    %v292 = vmul.f32 %v142, %v164
    %v293 = vmul.f32 %v143, %v152
    %v294 = vmul.f32 %v144, %v156
    %v295 = vmul.f32 %v145, %v160
    %v296 = vmul.f32 %v146, %v164
    %v297 = vld [vmem:[%s2] sm:$0xf]
    %v299 = vlaneseq
    %v300 = vshrl.u32 %v299, 7
    %v301 = vsub.s32 0, %v300
    %v302 = vrot.slane %v297, %v301
    %v303 = vlaneseq
    %v304 = vshrl.u32 %v303, 7
    %v305 = vsub.s32 1, %v304
    %v306 = vrot.slane %v297, %v305
    %v307 = vlaneseq
    %v308 = vshrl.u32 %v307, 7
    %v309 = vsub.s32 2, %v308
    %v310 = vrot.slane %v297, %v309
    %v311 = vlaneseq
    %v312 = vshrl.u32 %v311, 7
    %v313 = vsub.s32 3, %v312
    %v314 = vrot.slane %v297, %v313
    %v319 = vadd.f32 %v169, %v302
    %v320 = vadd.f32 %v170, %v306
    %v321 = vadd.f32 %v171, %v310
    %v322 = vadd.f32 %v172, %v314
    %v323 = vadd.f32 %v173, %v302
    %v324 = vadd.f32 %v174, %v306
    %v325 = vadd.f32 %v175, %v310
    %v326 = vadd.f32 %v176, %v314
    %v327 = vadd.f32 %v177, %v302
    %v328 = vadd.f32 %v178, %v306
    %v329 = vadd.f32 %v179, %v310
    %v330 = vadd.f32 %v180, %v314
    %v331 = vadd.f32 %v181, %v302
    %v332 = vadd.f32 %v182, %v306
    %v333 = vadd.f32 %v183, %v310
    %v334 = vadd.f32 %v184, %v314
    %v335 = vadd.f32 %v185, %v302
    %v336 = vadd.f32 %v186, %v306
    %v337 = vadd.f32 %v187, %v310
    %v338 = vadd.f32 %v188, %v314
    %v339 = vadd.f32 %v189, %v302
    %v340 = vadd.f32 %v190, %v306
    %v341 = vadd.f32 %v191, %v310
    %v342 = vadd.f32 %v192, %v314
    %v343 = vadd.f32 %v193, %v302
    %v344 = vadd.f32 %v194, %v306
    %v345 = vadd.f32 %v195, %v310
    %v346 = vadd.f32 %v196, %v314
    %v347 = vadd.f32 %v197, %v302
    %v348 = vadd.f32 %v198, %v306
    %v349 = vadd.f32 %v199, %v310
    %v350 = vadd.f32 %v200, %v314
    %v351 = vadd.f32 %v201, %v302
    %v352 = vadd.f32 %v202, %v306
    %v353 = vadd.f32 %v203, %v310
    %v354 = vadd.f32 %v204, %v314
    %v355 = vadd.f32 %v205, %v302
    %v356 = vadd.f32 %v206, %v306
    %v357 = vadd.f32 %v207, %v310
    %v358 = vadd.f32 %v208, %v314
    %v359 = vadd.f32 %v209, %v302
    %v360 = vadd.f32 %v210, %v306
    %v361 = vadd.f32 %v211, %v310
    %v362 = vadd.f32 %v212, %v314
    %v363 = vadd.f32 %v213, %v302
    %v364 = vadd.f32 %v214, %v306
    %v365 = vadd.f32 %v215, %v310
    %v366 = vadd.f32 %v216, %v314
    %v367 = vadd.f32 %v217, %v302
    %v368 = vadd.f32 %v218, %v306
    %v369 = vadd.f32 %v219, %v310
    %v370 = vadd.f32 %v220, %v314
    %v371 = vadd.f32 %v221, %v302
    %v372 = vadd.f32 %v222, %v306
    %v373 = vadd.f32 %v223, %v310
    %v374 = vadd.f32 %v224, %v314
    %v375 = vadd.f32 %v225, %v302
    %v376 = vadd.f32 %v226, %v306
    %v377 = vadd.f32 %v227, %v310
    %v378 = vadd.f32 %v228, %v314
    %v379 = vadd.f32 %v229, %v302
    %v380 = vadd.f32 %v230, %v306
    %v381 = vadd.f32 %v231, %v310
    %v382 = vadd.f32 %v232, %v314
    %v383 = vadd.f32 %v233, %v302
    %v384 = vadd.f32 %v234, %v306
    %v385 = vadd.f32 %v235, %v310
    %v386 = vadd.f32 %v236, %v314
    %v387 = vadd.f32 %v237, %v302
    %v388 = vadd.f32 %v238, %v306
    %v389 = vadd.f32 %v239, %v310
    %v390 = vadd.f32 %v240, %v314
    %v391 = vadd.f32 %v241, %v302
    %v392 = vadd.f32 %v242, %v306
    %v393 = vadd.f32 %v243, %v310
    %v394 = vadd.f32 %v244, %v314
    %v395 = vadd.f32 %v245, %v302
    %v396 = vadd.f32 %v246, %v306
    %v397 = vadd.f32 %v247, %v310
    %v398 = vadd.f32 %v248, %v314
    %v399 = vadd.f32 %v249, %v302
    %v400 = vadd.f32 %v250, %v306
    %v401 = vadd.f32 %v251, %v310
    %v402 = vadd.f32 %v252, %v314
    %v403 = vadd.f32 %v253, %v302
    %v404 = vadd.f32 %v254, %v306
    %v405 = vadd.f32 %v255, %v310
    %v406 = vadd.f32 %v256, %v314
    %v407 = vadd.f32 %v257, %v302
    %v408 = vadd.f32 %v258, %v306
    %v409 = vadd.f32 %v259, %v310
    %v410 = vadd.f32 %v260, %v314
    %v411 = vadd.f32 %v261, %v302
    %v412 = vadd.f32 %v262, %v306
    %v413 = vadd.f32 %v263, %v310
    %v414 = vadd.f32 %v264, %v314
    %v415 = vadd.f32 %v265, %v302
    %v416 = vadd.f32 %v266, %v306
    %v417 = vadd.f32 %v267, %v310
    %v418 = vadd.f32 %v268, %v314
    %v419 = vadd.f32 %v269, %v302
    %v420 = vadd.f32 %v270, %v306
    %v421 = vadd.f32 %v271, %v310
    %v422 = vadd.f32 %v272, %v314
    %v423 = vadd.f32 %v273, %v302
    %v424 = vadd.f32 %v274, %v306
    %v425 = vadd.f32 %v275, %v310
    %v426 = vadd.f32 %v276, %v314
    %v427 = vadd.f32 %v277, %v302
    %v428 = vadd.f32 %v278, %v306
    %v429 = vadd.f32 %v279, %v310
    %v430 = vadd.f32 %v280, %v314
    %v431 = vadd.f32 %v281, %v302
    %v432 = vadd.f32 %v282, %v306
    %v433 = vadd.f32 %v283, %v310
    %v434 = vadd.f32 %v284, %v314
    %v435 = vadd.f32 %v285, %v302
    %v436 = vadd.f32 %v286, %v306
    %v437 = vadd.f32 %v287, %v310
    %v438 = vadd.f32 %v288, %v314
    %v439 = vadd.f32 %v289, %v302
    %v440 = vadd.f32 %v290, %v306
    %v441 = vadd.f32 %v291, %v310
    %v442 = vadd.f32 %v292, %v314
    %v443 = vadd.f32 %v293, %v302
    %v444 = vadd.f32 %v294, %v306
    %v445 = vadd.f32 %v295, %v310
    %v446 = vadd.f32 %v296, %v314
    %v447 = vmax.f32 %v319, 0.0
    %v448 = vmax.f32 %v320, 0.0
    %v449 = vmax.f32 %v321, 0.0
    %v450 = vmax.f32 %v322, 0.0
    %v451 = vmax.f32 %v323, 0.0
    %v452 = vmax.f32 %v324, 0.0
    %v453 = vmax.f32 %v325, 0.0
    %v454 = vmax.f32 %v326, 0.0
    %v455 = vmax.f32 %v327, 0.0
    %v456 = vmax.f32 %v328, 0.0
    %v457 = vmax.f32 %v329, 0.0
    %v458 = vmax.f32 %v330, 0.0
    %v459 = vmax.f32 %v331, 0.0
    %v460 = vmax.f32 %v332, 0.0
    %v461 = vmax.f32 %v333, 0.0
    %v462 = vmax.f32 %v334, 0.0
    %v463 = vmax.f32 %v335, 0.0
    %v464 = vmax.f32 %v336, 0.0
    %v465 = vmax.f32 %v337, 0.0
    %v466 = vmax.f32 %v338, 0.0
    %v467 = vmax.f32 %v339, 0.0
    %v468 = vmax.f32 %v340, 0.0
    %v469 = vmax.f32 %v341, 0.0
    %v470 = vmax.f32 %v342, 0.0
    %v471 = vmax.f32 %v343, 0.0
    %v472 = vmax.f32 %v344, 0.0
    %v473 = vmax.f32 %v345, 0.0
    %v474 = vmax.f32 %v346, 0.0
    %v475 = vmax.f32 %v347, 0.0
    %v476 = vmax.f32 %v348, 0.0
    %v477 = vmax.f32 %v349, 0.0
    %v478 = vmax.f32 %v350, 0.0
    %v479 = vmax.f32 %v351, 0.0
    %v480 = vmax.f32 %v352, 0.0
    %v481 = vmax.f32 %v353, 0.0
    %v482 = vmax.f32 %v354, 0.0
    %v483 = vmax.f32 %v355, 0.0
    %v484 = vmax.f32 %v356, 0.0
    %v485 = vmax.f32 %v357, 0.0
    %v486 = vmax.f32 %v358, 0.0
    %v487 = vmax.f32 %v359, 0.0
    %v488 = vmax.f32 %v360, 0.0
    %v489 = vmax.f32 %v361, 0.0
    %v490 = vmax.f32 %v362, 0.0
    %v491 = vmax.f32 %v363, 0.0
    %v492 = vmax.f32 %v364, 0.0
    %v493 = vmax.f32 %v365, 0.0
    %v494 = vmax.f32 %v366, 0.0
    %v495 = vmax.f32 %v367, 0.0
    %v496 = vmax.f32 %v368, 0.0
    %v497 = vmax.f32 %v369, 0.0
    %v498 = vmax.f32 %v370, 0.0
    %v499 = vmax.f32 %v371, 0.0
    %v500 = vmax.f32 %v372, 0.0
    %v501 = vmax.f32 %v373, 0.0
    %v502 = vmax.f32 %v374, 0.0
    %v503 = vmax.f32 %v375, 0.0
    %v504 = vmax.f32 %v376, 0.0
    %v505 = vmax.f32 %v377, 0.0
    %v506 = vmax.f32 %v378, 0.0
    %v507 = vmax.f32 %v379, 0.0
    %v508 = vmax.f32 %v380, 0.0
    %v509 = vmax.f32 %v381, 0.0
    %v510 = vmax.f32 %v382, 0.0
    %v511 = vmax.f32 %v383, 0.0
    %v512 = vmax.f32 %v384, 0.0
    %v513 = vmax.f32 %v385, 0.0
    %v514 = vmax.f32 %v386, 0.0
    %v515 = vmax.f32 %v387, 0.0
    %v516 = vmax.f32 %v388, 0.0
    %v517 = vmax.f32 %v389, 0.0
    %v518 = vmax.f32 %v390, 0.0
    %v519 = vmax.f32 %v391, 0.0
    %v520 = vmax.f32 %v392, 0.0
    %v521 = vmax.f32 %v393, 0.0
    %v522 = vmax.f32 %v394, 0.0
    %v523 = vmax.f32 %v395, 0.0
    %v524 = vmax.f32 %v396, 0.0
    %v525 = vmax.f32 %v397, 0.0
    %v526 = vmax.f32 %v398, 0.0
    %v527 = vmax.f32 %v399, 0.0
    %v528 = vmax.f32 %v400, 0.0
    %v529 = vmax.f32 %v401, 0.0
    %v530 = vmax.f32 %v402, 0.0
    %v531 = vmax.f32 %v403, 0.0
    %v532 = vmax.f32 %v404, 0.0
    %v533 = vmax.f32 %v405, 0.0
    %v534 = vmax.f32 %v406, 0.0
    %v535 = vmax.f32 %v407, 0.0
    %v536 = vmax.f32 %v408, 0.0
    %v537 = vmax.f32 %v409, 0.0
    %v538 = vmax.f32 %v410, 0.0
    %v539 = vmax.f32 %v411, 0.0
    %v540 = vmax.f32 %v412, 0.0
    %v541 = vmax.f32 %v413, 0.0
    %v542 = vmax.f32 %v414, 0.0
    %v543 = vmax.f32 %v415, 0.0
    %v544 = vmax.f32 %v416, 0.0
    %v545 = vmax.f32 %v417, 0.0
    %v546 = vmax.f32 %v418, 0.0
    %v547 = vmax.f32 %v419, 0.0
    %v548 = vmax.f32 %v420, 0.0
    %v549 = vmax.f32 %v421, 0.0
    %v550 = vmax.f32 %v422, 0.0
    %v551 = vmax.f32 %v423, 0.0
    %v552 = vmax.f32 %v424, 0.0
    %v553 = vmax.f32 %v425, 0.0
    %v554 = vmax.f32 %v426, 0.0
    %v555 = vmax.f32 %v427, 0.0
    %v556 = vmax.f32 %v428, 0.0
    %v557 = vmax.f32 %v429, 0.0
    %v558 = vmax.f32 %v430, 0.0
    %v559 = vmax.f32 %v431, 0.0
    %v560 = vmax.f32 %v432, 0.0
    %v561 = vmax.f32 %v433, 0.0
    %v562 = vmax.f32 %v434, 0.0
    %v563 = vmax.f32 %v435, 0.0
    %v564 = vmax.f32 %v436, 0.0
    %v565 = vmax.f32 %v437, 0.0
    %v566 = vmax.f32 %v438, 0.0
    %v567 = vmax.f32 %v439, 0.0
    %v568 = vmax.f32 %v440, 0.0
    %v569 = vmax.f32 %v441, 0.0
    %v570 = vmax.f32 %v442, 0.0
    %v571 = vmax.f32 %v443, 0.0
    %v572 = vmax.f32 %v444, 0.0
    %v573 = vmax.f32 %v445, 0.0
    %v574 = vmax.f32 %v446, 0.0
    %v575 = vadd.f32 %v447, %v451
    %v576 = vadd.f32 %v448, %v452
    %v577 = vadd.f32 %v449, %v453
    %v578 = vadd.f32 %v450, %v454
    %v579 = vadd.f32 %v455, %v459
    %v580 = vadd.f32 %v456, %v460
    %v581 = vadd.f32 %v457, %v461
    %v582 = vadd.f32 %v458, %v462
    %v583 = vadd.f32 %v463, %v467
    %v584 = vadd.f32 %v464, %v468
    %v585 = vadd.f32 %v465, %v469
    %v586 = vadd.f32 %v466, %v470
    %v587 = vadd.f32 %v471, %v475
    %v588 = vadd.f32 %v472, %v476
    %v589 = vadd.f32 %v473, %v477
    %v590 = vadd.f32 %v474, %v478
    %v591 = vadd.f32 %v479, %v483
    %v592 = vadd.f32 %v480, %v484
    %v593 = vadd.f32 %v481, %v485
    %v594 = vadd.f32 %v482, %v486
    %v595 = vadd.f32 %v487, %v491
    %v596 = vadd.f32 %v488, %v492
    %v597 = vadd.f32 %v489, %v493
    %v598 = vadd.f32 %v490, %v494
    %v599 = vadd.f32 %v495, %v499
    %v600 = vadd.f32 %v496, %v500
    %v601 = vadd.f32 %v497, %v501
    %v602 = vadd.f32 %v498, %v502
    %v603 = vadd.f32 %v503, %v507
    %v604 = vadd.f32 %v504, %v508
    %v605 = vadd.f32 %v505, %v509
    %v606 = vadd.f32 %v506, %v510
    %v607 = vadd.f32 %v511, %v515
    %v608 = vadd.f32 %v512, %v516
    %v609 = vadd.f32 %v513, %v517
    %v610 = vadd.f32 %v514, %v518
    %v611 = vadd.f32 %v519, %v523
    %v612 = vadd.f32 %v520, %v524
    %v613 = vadd.f32 %v521, %v525
    %v614 = vadd.f32 %v522, %v526
    %v615 = vadd.f32 %v527, %v531
    %v616 = vadd.f32 %v528, %v532
    %v617 = vadd.f32 %v529, %v533
    %v618 = vadd.f32 %v530, %v534
    %v619 = vadd.f32 %v535, %v539
    %v620 = vadd.f32 %v536, %v540
    %v621 = vadd.f32 %v537, %v541
    %v622 = vadd.f32 %v538, %v542
    %v623 = vadd.f32 %v543, %v547
    %v624 = vadd.f32 %v544, %v548
    %v625 = vadd.f32 %v545, %v549
    %v626 = vadd.f32 %v546, %v550
    %v627 = vadd.f32 %v551, %v555
    %v628 = vadd.f32 %v552, %v556
    %v629 = vadd.f32 %v553, %v557
    %v630 = vadd.f32 %v554, %v558
    %v631 = vadd.f32 %v559, %v563
    %v632 = vadd.f32 %v560, %v564
    %v633 = vadd.f32 %v561, %v565
    %v634 = vadd.f32 %v562, %v566
    %v635 = vadd.f32 %v567, %v571
    %v636 = vadd.f32 %v568, %v572
    %v637 = vadd.f32 %v569, %v573
    %v638 = vadd.f32 %v570, %v574
    %v639 = vadd.f32 %v575, %v577
    %v640 = vadd.f32 %v576, %v578
    %v641 = vadd.f32 %v579, %v581
    %v642 = vadd.f32 %v580, %v582
    %v643 = vadd.f32 %v583, %v585
    %v644 = vadd.f32 %v584, %v586
    %v645 = vadd.f32 %v587, %v589
    %v646 = vadd.f32 %v588, %v590
    %v647 = vadd.f32 %v591, %v593
    %v648 = vadd.f32 %v592, %v594
    %v649 = vadd.f32 %v595, %v597
    %v650 = vadd.f32 %v596, %v598
    %v651 = vadd.f32 %v599, %v601
    %v652 = vadd.f32 %v600, %v602
    %v653 = vadd.f32 %v603, %v605
    %v654 = vadd.f32 %v604, %v606
    %v655 = vadd.f32 %v607, %v609
    %v656 = vadd.f32 %v608, %v610
    %v657 = vadd.f32 %v611, %v613
    %v658 = vadd.f32 %v612, %v614
    %v659 = vadd.f32 %v615, %v617
    %v660 = vadd.f32 %v616, %v618
    %v661 = vadd.f32 %v619, %v621
    %v662 = vadd.f32 %v620, %v622
    %v663 = vadd.f32 %v623, %v625
    %v664 = vadd.f32 %v624, %v626
    %v665 = vadd.f32 %v627, %v629
    %v666 = vadd.f32 %v628, %v630
    %v667 = vadd.f32 %v631, %v633
    %v668 = vadd.f32 %v632, %v634
    %v669 = vadd.f32 %v635, %v637
    %v670 = vadd.f32 %v636, %v638
    %v671 = vmul.f32 %v639, 0.25
    %v672 = vmul.f32 %v640, 0.25
    %v673 = vmul.f32 %v641, 0.25
    %v674 = vmul.f32 %v642, 0.25
    %v675 = vmul.f32 %v643, 0.25
    %v676 = vmul.f32 %v644, 0.25
    %v677 = vmul.f32 %v645, 0.25
    %v678 = vmul.f32 %v646, 0.25
    %v679 = vmul.f32 %v647, 0.25
    %v680 = vmul.f32 %v648, 0.25
    %v681 = vmul.f32 %v649, 0.25
    %v682 = vmul.f32 %v650, 0.25
    %v683 = vmul.f32 %v651, 0.25
    %v684 = vmul.f32 %v652, 0.25
    %v685 = vmul.f32 %v653, 0.25
    %v686 = vmul.f32 %v654, 0.25
    %v687 = vmul.f32 %v655, 0.25
    %v688 = vmul.f32 %v656, 0.25
    %v689 = vmul.f32 %v657, 0.25
    %v690 = vmul.f32 %v658, 0.25
    %v691 = vmul.f32 %v659, 0.25
    %v692 = vmul.f32 %v660, 0.25
    %v693 = vmul.f32 %v661, 0.25
    %v694 = vmul.f32 %v662, 0.25
    %v695 = vmul.f32 %v663, 0.25
    %v696 = vmul.f32 %v664, 0.25
    %v697 = vmul.f32 %v665, 0.25
    %v698 = vmul.f32 %v666, 0.25
    %v699 = vmul.f32 %v667, 0.25
    %v700 = vmul.f32 %v668, 0.25
    %v701 = vmul.f32 %v669, 0.25
    %v702 = vmul.f32 %v670, 0.25
    %v703 = vpack.c.bf16 %v673, %v671
    %v704 = vpack.c.bf16 %v674, %v672
    %v705 = vpack.c.bf16 %v677, %v675
    %v706 = vpack.c.bf16 %v678, %v676
    %v707 = vpack.c.bf16 %v681, %v679
    %v708 = vpack.c.bf16 %v682, %v680
    %v709 = vpack.c.bf16 %v685, %v683
    %v710 = vpack.c.bf16 %v686, %v684
    %v711 = vpack.c.bf16 %v689, %v687
    %v712 = vpack.c.bf16 %v690, %v688
    %v713 = vpack.c.bf16 %v693, %v691
    %v714 = vpack.c.bf16 %v694, %v692
    %v715 = vpack.c.bf16 %v697, %v695
    %v716 = vpack.c.bf16 %v698, %v696
    %v717 = vpack.c.bf16 %v701, %v699
    %v718 = vpack.c.bf16 %v702, %v700
    %v719 = vld [vmem:[%s3] sm:$0xf]
    %v720 = vld [vmem:[%s3 + $0x4] sm:$0xf]
    %v721 = vld [vmem:[%s3 + $0x8] sm:$0xf]
    %v722 = vld [vmem:[%s3 + $0xc] sm:$0xf]
    %v723 = vld [vmem:[%s3 + $0x10] sm:$0xf]
    %v724 = vld [vmem:[%s3 + $0x14] sm:$0xf]
    %v725 = vld [vmem:[%s3 + $0x18] sm:$0xf]
    %v726 = vld [vmem:[%s3 + $0x1c] sm:$0xf]
    %v727 = vld [vmem:[%s3 + $0x20] sm:$0xf]
    %v728 = vld [vmem:[%s3 + $0x24] sm:$0xf]
    %v729 = vld [vmem:[%s3 + $0x28] sm:$0xf]
    %v730 = vld [vmem:[%s3 + $0x2c] sm:$0xf]
    %v731 = vld [vmem:[%s3 + $0x30] sm:$0xf]
    %v732 = vld [vmem:[%s3 + $0x34] sm:$0xf]
    %v733 = vld [vmem:[%s3 + $0x38] sm:$0xf]
    %v734 = vld [vmem:[%s3 + $0x3c] sm:$0xf]
    %v735 = vld [vmem:[%s3 + $0x40] sm:$0xf]
    %v736 = vld [vmem:[%s3 + $0x44] sm:$0xf]
    %v737 = vld [vmem:[%s3 + $0x48] sm:$0xf]
    %v738 = vld [vmem:[%s3 + $0x4c] sm:$0xf]
    %v739 = vld [vmem:[%s3 + $0x50] sm:$0xf]
    %v740 = vld [vmem:[%s3 + $0x54] sm:$0xf]
    %v741 = vld [vmem:[%s3 + $0x58] sm:$0xf]
    %v742 = vld [vmem:[%s3 + $0x5c] sm:$0xf]
    %v743 = vld [vmem:[%s3 + $0x60] sm:$0xf]
    %v744 = vld [vmem:[%s3 + $0x64] sm:$0xf]
    %v745 = vld [vmem:[%s3 + $0x68] sm:$0xf]
    %v746 = vld [vmem:[%s3 + $0x6c] sm:$0xf]
    %v747 = vld [vmem:[%s3 + $0x70] sm:$0xf]
    %v748 = vld [vmem:[%s3 + $0x74] sm:$0xf]
    %v749 = vld [vmem:[%s3 + $0x78] sm:$0xf]
    %v750 = vld [vmem:[%s3 + $0x7c] sm:$0xf]
    %v783 = vunpack.c.l.b16 %v719
    %v784 = vunpack.c.l.b16 %v720
    %v785 = vunpack.c.l.b16 %v721
    %v786 = vunpack.c.l.b16 %v722
    %v787 = vunpack.c.l.b16 %v723
    %v788 = vunpack.c.l.b16 %v724
    %v789 = vunpack.c.l.b16 %v725
    %v790 = vunpack.c.l.b16 %v726
    %v791 = vunpack.c.l.b16 %v727
    %v792 = vunpack.c.l.b16 %v728
    %v793 = vunpack.c.l.b16 %v729
    %v794 = vunpack.c.l.b16 %v730
    %v795 = vunpack.c.l.b16 %v731
    %v796 = vunpack.c.l.b16 %v732
    %v797 = vunpack.c.l.b16 %v733
    %v798 = vunpack.c.l.b16 %v734
    %v799 = vunpack.c.l.b16 %v735
    %v800 = vunpack.c.l.b16 %v736
    %v801 = vunpack.c.l.b16 %v737
    %v802 = vunpack.c.l.b16 %v738
    %v803 = vunpack.c.l.b16 %v739
    %v804 = vunpack.c.l.b16 %v740
    %v805 = vunpack.c.l.b16 %v741
    %v806 = vunpack.c.l.b16 %v742
    %v807 = vunpack.c.l.b16 %v743
    %v808 = vunpack.c.l.b16 %v744
    %v809 = vunpack.c.l.b16 %v745
    %v810 = vunpack.c.l.b16 %v746
    %v811 = vunpack.c.l.b16 %v747
    %v812 = vunpack.c.l.b16 %v748
    %v813 = vunpack.c.l.b16 %v749
    %v814 = vunpack.c.l.b16 %v750
    %v815 = vpack.c.b16 %v784, %v783
    %v816 = vpack.c.b16 %v786, %v785
    %v817 = vpack.c.b16 %v788, %v787
    %v818 = vpack.c.b16 %v790, %v789
    %v819 = vpack.c.b16 %v792, %v791
    %v820 = vpack.c.b16 %v794, %v793
    %v821 = vpack.c.b16 %v796, %v795
    %v822 = vpack.c.b16 %v798, %v797
    %v823 = vpack.c.b16 %v800, %v799
    %v824 = vpack.c.b16 %v802, %v801
    %v825 = vpack.c.b16 %v804, %v803
    %v826 = vpack.c.b16 %v806, %v805
    %v827 = vpack.c.b16 %v808, %v807
    %v828 = vpack.c.b16 %v810, %v809
    %v829 = vpack.c.b16 %v812, %v811
    %v830 = vpack.c.b16 %v814, %v813
    %847 = vmatprep.subr.bf16.mxu0 0
    %848 = vmatpush1.bf16.msra.mxu0 %v815
    %849 = vmatprep.subr.bf16.mxu0 0
    %850 = vmatpush1.bf16.msra.mxu0 %v816
    %851 = vmatprep.subr.bf16.mxu0 0
    %852 = vmatpush1.bf16.msra.mxu0 %v817
    %853 = vmatprep.subr.bf16.mxu0 0
    %854 = vmatpush1.bf16.msra.mxu0 %v818
    %855 = vmatprep.subr.bf16.mxu0 0
    %856 = vmatpush1.bf16.msra.mxu0 %v819
    %857 = vmatprep.subr.bf16.mxu0 0
    %858 = vmatpush1.bf16.msra.mxu0 %v820
    %859 = vmatprep.subr.bf16.mxu0 0
    %860 = vmatpush1.bf16.msra.mxu0 %v821
    %861 = vmatprep.subr.bf16.mxu0 0
    %862 = vmatpush1.bf16.msra.mxu0 %v822
    %863 = vmatprep.subr.bf16.mxu0 0
    %864 = vmatpush1.bf16.msra.mxu0 %v823
    %865 = vmatprep.subr.bf16.mxu0 0
    %866 = vmatpush1.bf16.msra.mxu0 %v824
    %867 = vmatprep.subr.bf16.mxu0 0
    %868 = vmatpush1.bf16.msra.mxu0 %v825
    %869 = vmatprep.subr.bf16.mxu0 0
    %870 = vmatpush1.bf16.msra.mxu0 %v826
    %871 = vmatprep.subr.bf16.mxu0 0
    %872 = vmatpush1.bf16.msra.mxu0 %v827
    %873 = vmatprep.subr.bf16.mxu0 0
    %874 = vmatpush1.bf16.msra.mxu0 %v828
    %875 = vmatprep.subr.bf16.mxu0 0
    %876 = vmatpush1.bf16.msra.mxu0 %v829
    %877 = vmatprep.subr.bf16.mxu0 0
    %878 = vmatpush1.bf16.msra.mxu0 %v830
    %879 = vmatprep.mubr.bf16.mxu0 %v704
    %880 = vmatmul.mubr.bf16.gmra.mrb[0].mxu0 %v703
    %v881 = vpop.f32.mrb[0].mxu0
    %v882 = vadd.f32 0.0, %v881
    %v883 = vpop.f32.mrb[0].mxu0
    %v884 = vpop.f32.mrb[0].mxu0
    %v885 = vadd.f32 0.0, %v884
    %v886 = vpop.f32.mrb[0].mxu0
    %887 = vmatprep.mubr.bf16.mxu0 %v706
    %888 = vmatmul.mubr.bf16.gmra.mrb[0].mxu0 %v705
    %v889 = vpop.f32.mrb[0].mxu0
    %v890 = vadd.f32 0.0, %v889
    %v891 = vpop.f32.mrb[0].mxu0
    %v892 = vpop.f32.mrb[0].mxu0
    %v893 = vadd.f32 0.0, %v892
    %v894 = vpop.f32.mrb[0].mxu0
    %895 = vmatprep.mubr.bf16.mxu0 %v708
    %896 = vmatmul.mubr.bf16.gmra.mrb[0].mxu0 %v707
    %v897 = vpop.f32.mrb[0].mxu0
    %v898 = vadd.f32 0.0, %v897
    %v899 = vpop.f32.mrb[0].mxu0
    %v900 = vpop.f32.mrb[0].mxu0
    %v901 = vadd.f32 0.0, %v900
    %v902 = vpop.f32.mrb[0].mxu0
    %903 = vmatprep.mubr.bf16.mxu0 %v710
    %904 = vmatmul.mubr.bf16.gmra.mrb[0].mxu0 %v709
    %v905 = vpop.f32.mrb[0].mxu0
    %v906 = vadd.f32 0.0, %v905
    %v907 = vpop.f32.mrb[0].mxu0
    %v908 = vpop.f32.mrb[0].mxu0
    %v909 = vadd.f32 0.0, %v908
    %v910 = vpop.f32.mrb[0].mxu0
    %911 = vmatprep.mubr.bf16.mxu0 %v712
    %912 = vmatmul.mubr.bf16.gmra.mrb[0].mxu0 %v711
    %v913 = vpop.f32.mrb[0].mxu0
    %v914 = vadd.f32 0.0, %v913
    %v915 = vpop.f32.mrb[0].mxu0
    %v916 = vpop.f32.mrb[0].mxu0
    %v917 = vadd.f32 0.0, %v916
    %v918 = vpop.f32.mrb[0].mxu0
    %919 = vmatprep.mubr.bf16.mxu0 %v714
    %920 = vmatmul.mubr.bf16.gmra.mrb[0].mxu0 %v713
    %v921 = vpop.f32.mrb[0].mxu0
    %v922 = vadd.f32 0.0, %v921
    %v923 = vpop.f32.mrb[0].mxu0
    %v924 = vpop.f32.mrb[0].mxu0
    %v925 = vadd.f32 0.0, %v924
    %v926 = vpop.f32.mrb[0].mxu0
    %927 = vmatprep.mubr.bf16.mxu0 %v716
    %928 = vmatmul.mubr.bf16.gmra.mrb[0].mxu0 %v715
    %v929 = vpop.f32.mrb[0].mxu0
    %v930 = vadd.f32 0.0, %v929
    %v931 = vpop.f32.mrb[0].mxu0
    %v932 = vpop.f32.mrb[0].mxu0
    %v933 = vadd.f32 0.0, %v932
    %v934 = vpop.f32.mrb[0].mxu0
    %935 = vmatprep.mubr.bf16.mxu0 %v718
    %936 = vmatmul.mubr.bf16.gmra.mrb[0].mxu0 %v717
    %v937 = vpop.f32.mrb[0].mxu0
    %v938 = vadd.f32 0.0, %v937
    %v939 = vpop.f32.mrb[0].mxu0
    %v940 = vpop.f32.mrb[0].mxu0
    %v941 = vadd.f32 0.0, %v940
    %v942 = vpop.f32.mrb[0].mxu0
    %943 = vdwg.mxu0
    %944 = vst [vmem:[#allocation2] sm:$0xff] %v882
    %945 = vst [vmem:[#allocation2 + $0x8] sm:$0xff] %v885
    %946 = vst [vmem:[#allocation2 + $0x10] sm:$0xff] %v890
    %947 = vst [vmem:[#allocation2 + $0x18] sm:$0xff] %v893
    %948 = vst [vmem:[#allocation2 + $0x20] sm:$0xff] %v898
    %949 = vst [vmem:[#allocation2 + $0x28] sm:$0xff] %v901
    %950 = vst [vmem:[#allocation2 + $0x30] sm:$0xff] %v906
    %951 = vst [vmem:[#allocation2 + $0x38] sm:$0xff] %v909
    %952 = vst [vmem:[#allocation2 + $0x40] sm:$0xff] %v914
    %953 = vst [vmem:[#allocation2 + $0x48] sm:$0xff] %v917
    %954 = vst [vmem:[#allocation2 + $0x50] sm:$0xff] %v922
    %955 = vst [vmem:[#allocation2 + $0x58] sm:$0xff] %v925
    %956 = vst [vmem:[#allocation2 + $0x60] sm:$0xff] %v930
    %957 = vst [vmem:[#allocation2 + $0x68] sm:$0xff] %v933
    %958 = vst [vmem:[#allocation2 + $0x70] sm:$0xff] %v938
    %959 = vst [vmem:[#allocation2 + $0x78] sm:$0xff] %v941
    // Predicated region
    $region18: #{transition_forward.1} parent=1 // pred_check
      _
    $region19: #{transition_forward.1} parent=1 // pred_check_branch
      %961 = sbr.rel (0) target = $region21
    $region20: #{transition_forward.1} parent=1 // pred_region
      %s963 = ssub.s32 2048, 2048
      %964 = vsyncadd [#allocation3], %s963
      %s965 = sshll.u32 [#allocation2], 4
      %s966 = int_to_ptr.vmem [resolvable:$true] %s965
      %971 = dma.vmem_to_hbm [thread:$0]  %s966, 2048, %s4, [#allocation3], 128, 128, 8
    $region21: #{transition_forward.1} parent=1 // pred_fallthru
      _
    // Predicated region
    $region22: #{transition_forward.1} parent=1 // pred_check
      _
    $region23: #{transition_forward.1} parent=1 // pred_check_branch
      %973 = sbr.rel (0) target = $region25
    $region24: #{transition_forward.1} parent=1 // pred_region
      %974 = dma.done [#allocation3], 2048
    $region25: #{transition_forward.1} parent=1 // pred_fallthru
      _
    %975 = vsyncpa [#allocation3], 1

</llo_original>
